<compile_context>
chip_gen: v6e
topology: v6e:2x2x1
jax: 0.10.0
libtpu: 0.0.40
codegen_flags: <defaults>
</compile_context>

<pallas_src>
import functools

import jax
import jax.numpy as jnp
from jax import lax
from jax.experimental import pallas as pl
from jax.experimental.pallas import tpu as pltpu

LRELU_SLOPE = 0.2
BN_EPS = 1e-5


def _round_up(v, m):
    return (v + m - 1) // m * m


# ---------------------------------------------------------------------------
# Fused kernel: stride-1 "VALID" conv (taps_h x taps_w) + bias + activation.
# One grid step per batch element; channels live on the lane axis.
#   x_ref : (HIN, WIN, CK)      input (already zero padded / space-to-depth'ed)
#   w_ref : (KH, KW, CK, COUT)  per-tap weight matrices
#   b_ref : (1, COUT)           bias (BatchNorm already folded in)
#   o_ref : (OH, OWP, COUT)     output (width padded to a multiple of 8)
# ---------------------------------------------------------------------------
def _conv_act_kernel(x_ref, w_ref, b_ref, o_ref, *, taps_h, taps_w, oh, owp, act):
    ck = x_ref.shape[-1]
    cout = o_ref.shape[-1]
    acc = jnp.zeros((oh * owp, cout), jnp.float32) + b_ref[...]
    for kh in range(taps_h):
        for kw in range(taps_w):
            patch = x_ref[kh:kh + oh, kw:kw + owp, :]            # (OH, OWP, CK)
            acc = acc + jnp.dot(patch.reshape(oh * owp, ck),     # OWP % 8 == 0 -> free retile
                                w_ref[kh, kw, :, :],
                                preferred_element_type=jnp.float32)
    if act == "lrelu":
        acc = jnp.where(acc > 0.0, acc, LRELU_SLOPE * acc)
    elif act == "sigmoid":
        acc = jax.nn.sigmoid(acc)
    o_ref[...] = acc.reshape(oh, owp, cout).astype(o_ref.dtype)


def conv_block(x, w, b, *, stride, act):
    """Conv2d(kernel=4, stride, padding=2) + bias + activation on NHWC input."""
    B, H, W, Cin = x.shape
    Cout = w.shape[0]
    OH = (H + 4 - 4) // stride + 1
    OW = (W + 4 - 4) // stride + 1
    OWp = _round_up(OW, 8)            # lane/sublane-friendly output width

    if stride == 2:
        # k=4,s=2,p=2  ==  k=2,s=1 VALID conv on space-to-depth(2) of the padded input.
        HP, WP = 2 * (OH + 1), 2 * (OWp + 1)
        xp = jnp.pad(x, ((0, 0), (2, HP - 2 - H), (2, WP - 2 - W), (0, 0)))
        HY, WY = HP // 2, WP // 2
        y = (xp.reshape(B, HY, 2, WY, 2, Cin)
                .transpose(0, 1, 3, 2, 4, 5)
                .reshape(B, HY, WY, 4 * Cin))
        wk = (w.reshape(Cout, Cin, 2, 2, 2, 2)       # (o, c, a, p, b, q), kh=2a+p kw=2b+q
                .transpose(2, 4, 3, 5, 1, 0)          # (a, b, p, q, c, o)
                .reshape(2, 2, 4 * Cin, Cout))
        KH = KW = 2
    else:
        HY, WY = OH + 3, OWp + 3
        y = jnp.pad(x, ((0, 0), (2, HY - 2 - H), (2, WY - 2 - W), (0, 0)))
        wk = w.transpose(2, 3, 1, 0)                  # (kh, kw, c, o)
        KH = KW = 4

    CK = y.shape[-1]
    y = y.astype(jnp.float32)
    wk = wk.astype(jnp.float32)
    b2 = b.reshape(1, Cout).astype(jnp.float32)

    flops = 2 * B * KH * KW * OH * OWp * CK * Cout
    bytes_accessed = 4 * (y.size + wk.size + b2.size + B * OH * OWp * Cout)

    out = pl.pallas_call(
        functools.partial(_conv_act_kernel, taps_h=KH, taps_w=KW,
                          oh=OH, owp=OWp, act=act),
        out_shape=jax.ShapeDtypeStruct((B, OH, OWp, Cout), jnp.float32),
        grid=(B,),
        in_specs=[
            pl.BlockSpec((None, HY, WY, CK), lambda i: (i, 0, 0, 0)),
            pl.BlockSpec((KH, KW, CK, Cout), lambda i: (0, 0, 0, 0)),
            pl.BlockSpec((1, Cout), lambda i: (0, 0)),
        ],
        out_specs=pl.BlockSpec((None, OH, OWp, Cout), lambda i: (i, 0, 0, 0)),
        compiler_params=pltpu.CompilerParams(dimension_semantics=("parallel",)),
        cost_estimate=pl.CostEstimate(flops=int(flops), transcendentals=0,
                                      bytes_accessed=int(bytes_accessed)),
    )(y, wk, b2)
    return out[:, :, :OW, :]          # drop the lane-padding columns


def fold_bn(w, b, bn):
    """Fold eval-mode BatchNorm2d (running stats) into conv weight/bias."""
    if bn is None:
        return w, b
    inv = bn["gamma"] / jnp.sqrt(bn["var"] + BN_EPS)
    return w * inv[:, None, None, None], (b - bn["mean"]) * inv + bn["beta"]


def nlayer_discriminator(x_nchw, params, *, use_sigmoid=False, get_interm_feat=False):
    """Forward pass of NLayerDiscriminator; NCHW in/out, like the PyTorch module."""
    x = jnp.transpose(x_nchw, (0, 2, 3, 1)).astype(jnp.float32)   # NCHW -> NHWC
    n = len(params)
    feats = []
    for li, layer in enumerate(params):
        w, b = fold_bn(layer["w"], layer["b"], layer["bn"])
        last = li == n - 1
        act = ("sigmoid" if use_sigmoid else "none") if last else "lrelu"
        x = conv_block(x, w, b, stride=layer["stride"], act=act)
        feats.append(x)
    if get_interm_feat:
        return [jnp.transpose(f, (0, 3, 1, 2)) for f in feats]
    return jnp.transpose(feats[-1], (0, 3, 1, 2))


# ---------------------------------------------------------------------------
# Pure-JAX reference (exact PyTorch semantics, eval-mode BN) for verification.
# ---------------------------------------------------------------------------
def reference(x_nchw, params, *, use_sigmoid=False, get_interm_feat=False):
    x = x_nchw.astype(jnp.float32)
    n = len(params)
    feats = []
    for li, layer in enumerate(params):
        s = layer["stride"]
        y = lax.conv_general_dilated(
            x, layer["w"], (s, s), ((2, 2), (2, 2)),
            dimension_numbers=("NCHW", "OIHW", "NCHW"),
            precision=lax.Precision.HIGHEST)
        y = y + layer["b"][None, :, None, None]
        bn = layer["bn"]
        if bn is not None:
            inv = bn["gamma"] / jnp.sqrt(bn["var"] + BN_EPS)
            y = (y - bn["mean"][None, :, None, None]) * inv[None, :, None, None] \
                + bn["beta"][None, :, None, None]
        if li < n - 1:
            y = jnp.where(y > 0.0, y, LRELU_SLOPE * y)
        elif use_sigmoid:
            y = jax.nn.sigmoid(y)
        x = y
        feats.append(x)
    return feats if get_interm_feat else feats[-1]


def make_params(key, *, input_nc, ndf, n_layers):
    # (cin, cout, stride, has_bn) for each sequence entry of NLayerDiscriminator
    specs = [(input_nc, ndf, 2, False)]
    nf = ndf
    for _ in range(1, n_layers):
        nf_prev, nf = nf, min(nf * 2, 512)
        specs.append((nf_prev, nf, 2, True))
    nf_prev, nf = nf, min(nf * 2, 512)
    specs.append((nf_prev, nf, 1, True))
    specs.append((nf, 1, 1, False))

    params = []
    for ci, co, stride, has_bn in specs:
        key, k1, k2, k3, k4, k5, k6 = jax.random.split(key, 7)
        layer = {
            "w": 0.1 * jax.random.normal(k1, (co, ci, 4, 4), jnp.float32),
            "b": 0.1 * jax.random.normal(k2, (co,), jnp.float32),
            "stride": stride,
            "bn": None,
        }
        if has_bn:
            layer["bn"] = {
                "gamma": 1.0 + 0.1 * jax.random.normal(k3, (co,), jnp.float32),
                "beta": 0.1 * jax.random.normal(k4, (co,), jnp.float32),
                "mean": 0.1 * jax.random.normal(k5, (co,), jnp.float32),
                "var": 0.5 + jax.nn.sigmoid(jax.random.normal(k6, (co,), jnp.float32)),
            }
        params.append(layer)
    return params


if __name__ == "__main__":
    B, input_nc, H, W = 2, 3, 16, 16
    ndf, n_layers = 8, 3               # small test-scale discriminator (real default ndf=64)

    key = jax.random.PRNGKey(0)
    key, kx = jax.random.split(key)
    x = jax.random.normal(kx, (B, input_nc, H, W), jnp.float32)
    params = make_params(key, input_nc=input_nc, ndf=ndf, n_layers=n_layers)

    out = nlayer_discriminator(x, params)       # use_sigmoid=False, getIntermFeat=False
    out = jax.block_until_ready(out)

    ref = reference(x, params)
    assert out.shape == ref.shape == (B, 1, 5, 5), (out.shape, ref.shape)
    assert jnp.allclose(out, ref, rtol=2e-2, atol=2e-2), \
        float(jnp.max(jnp.abs(out - ref)))
    print("KERNEL_OK")
</pallas_src>

<mosaic_0001>
module attributes {stable_mosaic.version = 11 : i64} {
  func.func @_conv_act_kernel(%arg0: i32, %arg1: memref<1x10x17x12xf32, #tpu.memory_space<vmem>>, %arg2: memref<2x2x12x8xf32, #tpu.memory_space<vmem>>, %arg3: memref<1x8xf32, #tpu.memory_space<vmem>>, %arg4: memref<1x9x16x8xf32, #tpu.memory_space<vmem>>) attributes {dimension_semantics = [#tpu.dimension_semantics<parallel>], iteration_bounds = array<i64: 2>, scalar_prefetch = 0 : i64, scratch_operands = 0 : i64, tpu.core_type = #tpu.core_type<tc>, window_params = [{transform_indices = @transform_0, window_bounds = array<i64: 1, 10, 17, 12>}, {pipeline_mode = #tpu.pipeline_mode<synchronous>, transform_indices = @transform_1, window_bounds = array<i64: 2, 2, 12, 8>}, {pipeline_mode = #tpu.pipeline_mode<synchronous>, transform_indices = @transform_2, window_bounds = array<i64: 1, 8>}, {transform_indices = @transform_3, window_bounds = array<i64: 1, 9, 16, 8>}]} {
    %cst = arith.constant 0.000000e+00 : f32
    %0 = vector.broadcast %cst : f32 to vector<144x8xf32>
    %c0 = arith.constant 0 : index
    %c0_0 = arith.constant 0 : index
    %1 = vector.load %arg3[%c0, %c0_0] : memref<1x8xf32, #tpu.memory_space<vmem>>, vector<1x8xf32>
    %2 = vector.broadcast %1 : vector<1x8xf32> to vector<144x8xf32>
    %3 = arith.addf %0, %2 : vector<144x8xf32>
    %c0_1 = arith.constant 0 : index
    %c0_2 = arith.constant 0 : index
    %c0_3 = arith.constant 0 : index
    %c0_4 = arith.constant 0 : index
    %4 = vector.load %arg1[%c0_1, %c0_2, %c0_3, %c0_4] : memref<1x10x17x12xf32, #tpu.memory_space<vmem>>, vector<1x9x16x12xf32>
    %5 = vector.shape_cast %4 : vector<1x9x16x12xf32> to vector<9x16x12xf32>
    %6 = vector.shape_cast %5 : vector<9x16x12xf32> to vector<144x12xf32>
    %c0_5 = arith.constant 0 : index
    %c0_6 = arith.constant 0 : index
    %c0_7 = arith.constant 0 : index
    %c0_8 = arith.constant 0 : index
    %7 = vector.load %arg2[%c0_5, %c0_6, %c0_7, %c0_8] : memref<2x2x12x8xf32, #tpu.memory_space<vmem>>, vector<1x1x12x8xf32>
    %8 = vector.shape_cast %7 : vector<1x1x12x8xf32> to vector<12x8xf32>
    %cst_9 = arith.constant dense<0.000000e+00> : vector<144x8xf32>
    %9 = tpu.matmul %6, %8, %cst_9 {dimension_numbers = #tpu.dot_dimension_numbers<[1], [0], [0], [1], [0, 0, 1, 1], [], []>} : vector<144x12xf32>, vector<12x8xf32>, vector<144x8xf32> -> vector<144x8xf32>
    %10 = arith.addf %3, %9 : vector<144x8xf32>
    %c0_10 = arith.constant 0 : index
    %c0_11 = arith.constant 0 : index
    %c1 = arith.constant 1 : index
    %c0_12 = arith.constant 0 : index
    %11 = vector.load %arg1[%c0_10, %c0_11, %c1, %c0_12] : memref<1x10x17x12xf32, #tpu.memory_space<vmem>>, vector<1x9x16x12xf32>
    %12 = vector.shape_cast %11 : vector<1x9x16x12xf32> to vector<9x16x12xf32>
    %13 = vector.shape_cast %12 : vector<9x16x12xf32> to vector<144x12xf32>
    %c0_13 = arith.constant 0 : index
    %c1_14 = arith.constant 1 : index
    %c0_15 = arith.constant 0 : index
    %c0_16 = arith.constant 0 : index
    %14 = vector.load %arg2[%c0_13, %c1_14, %c0_15, %c0_16] : memref<2x2x12x8xf32, #tpu.memory_space<vmem>>, vector<1x1x12x8xf32>
    %15 = vector.shape_cast %14 : vector<1x1x12x8xf32> to vector<12x8xf32>
    %cst_17 = arith.constant dense<0.000000e+00> : vector<144x8xf32>
    %16 = tpu.matmul %13, %15, %cst_17 {dimension_numbers = #tpu.dot_dimension_numbers<[1], [0], [0], [1], [0, 0, 1, 1], [], []>} : vector<144x12xf32>, vector<12x8xf32>, vector<144x8xf32> -> vector<144x8xf32>
    %17 = arith.addf %10, %16 : vector<144x8xf32>
    %c0_18 = arith.constant 0 : index
    %c1_19 = arith.constant 1 : index
    %c0_20 = arith.constant 0 : index
    %c0_21 = arith.constant 0 : index
    %18 = vector.load %arg1[%c0_18, %c1_19, %c0_20, %c0_21] : memref<1x10x17x12xf32, #tpu.memory_space<vmem>>, vector<1x9x16x12xf32>
    %19 = vector.shape_cast %18 : vector<1x9x16x12xf32> to vector<9x16x12xf32>
    %20 = vector.shape_cast %19 : vector<9x16x12xf32> to vector<144x12xf32>
    %c1_22 = arith.constant 1 : index
    %c0_23 = arith.constant 0 : index
    %c0_24 = arith.constant 0 : index
    %c0_25 = arith.constant 0 : index
    %21 = vector.load %arg2[%c1_22, %c0_23, %c0_24, %c0_25] : memref<2x2x12x8xf32, #tpu.memory_space<vmem>>, vector<1x1x12x8xf32>
    %22 = vector.shape_cast %21 : vector<1x1x12x8xf32> to vector<12x8xf32>
    %cst_26 = arith.constant dense<0.000000e+00> : vector<144x8xf32>
    %23 = tpu.matmul %20, %22, %cst_26 {dimension_numbers = #tpu.dot_dimension_numbers<[1], [0], [0], [1], [0, 0, 1, 1], [], []>} : vector<144x12xf32>, vector<12x8xf32>, vector<144x8xf32> -> vector<144x8xf32>
    %24 = arith.addf %17, %23 : vector<144x8xf32>
    %c0_27 = arith.constant 0 : index
    %c1_28 = arith.constant 1 : index
    %c1_29 = arith.constant 1 : index
    %c0_30 = arith.constant 0 : index
    %25 = vector.load %arg1[%c0_27, %c1_28, %c1_29, %c0_30] : memref<1x10x17x12xf32, #tpu.memory_space<vmem>>, vector<1x9x16x12xf32>
    %26 = vector.shape_cast %25 : vector<1x9x16x12xf32> to vector<9x16x12xf32>
    %27 = vector.shape_cast %26 : vector<9x16x12xf32> to vector<144x12xf32>
    %c1_31 = arith.constant 1 : index
    %c1_32 = arith.constant 1 : index
    %c0_33 = arith.constant 0 : index
    %c0_34 = arith.constant 0 : index
    %28 = vector.load %arg2[%c1_31, %c1_32, %c0_33, %c0_34] : memref<2x2x12x8xf32, #tpu.memory_space<vmem>>, vector<1x1x12x8xf32>
    %29 = vector.shape_cast %28 : vector<1x1x12x8xf32> to vector<12x8xf32>
    %cst_35 = arith.constant dense<0.000000e+00> : vector<144x8xf32>
    %30 = tpu.matmul %27, %29, %cst_35 {dimension_numbers = #tpu.dot_dimension_numbers<[1], [0], [0], [1], [0, 0, 1, 1], [], []>} : vector<144x12xf32>, vector<12x8xf32>, vector<144x8xf32> -> vector<144x8xf32>
    %31 = arith.addf %24, %30 : vector<144x8xf32>
    %cst_36 = arith.constant 0.000000e+00 : f32
    %32 = vector.broadcast %cst_36 : f32 to vector<144x8xf32>
    %33 = arith.cmpf ogt, %31, %32 : vector<144x8xf32>
    %cst_37 = arith.constant 2.000000e-01 : f32
    %34 = vector.broadcast %cst_37 : f32 to vector<144x8xf32>
    %35 = arith.mulf %34, %31 : vector<144x8xf32>
    %36 = arith.select %33, %31, %35 : vector<144x8xi1>, vector<144x8xf32>
    %37 = vector.shape_cast %36 : vector<144x8xf32> to vector<9x16x8xf32>
    %c0_38 = arith.constant 0 : index
    %c0_39 = arith.constant 0 : index
    %c0_40 = arith.constant 0 : index
    %c0_41 = arith.constant 0 : index
    %38 = vector.load %arg4[%c0_38, %c0_39, %c0_40, %c0_41] : memref<1x9x16x8xf32, #tpu.memory_space<vmem>>, vector<1x9x16x8xf32>
    %39 = vector.shape_cast %38 : vector<1x9x16x8xf32> to vector<9x16x8xf32>
    %40 = vector.shape_cast %37 : vector<9x16x8xf32> to vector<1x9x16x8xf32>
    tpu.vector_store %arg4[%c0_38, %c0_39, %c0_40, %c0_41], %40 {strides = array<i32>} : memref<1x9x16x8xf32, #tpu.memory_space<vmem>>, vector<1x9x16x8xf32>,
    return
  }
  func.func @transform_0(%arg0: i32) -> (i32, i32, i32, i32) {
    %c0_i32 = arith.constant 0 : i32
    %c0_i32_0 = arith.constant 0 : i32
    %c0_i32_1 = arith.constant 0 : i32
    %c0_i32_2 = arith.constant 0 : i32
    return %arg0, %c0_i32, %c0_i32_0, %c0_i32_1 : i32, i32, i32, i32
  }
  func.func @transform_1(%arg0: i32) -> (i32, i32, i32, i32) {
    %c0_i32 = arith.constant 0 : i32
    %c0_i32_0 = arith.constant 0 : i32
    %c0_i32_1 = arith.constant 0 : i32
    %c0_i32_2 = arith.constant 0 : i32
    %c0_i32_3 = arith.constant 0 : i32
    return %c0_i32, %c0_i32_0, %c0_i32_1, %c0_i32_2 : i32, i32, i32, i32
  }
  func.func @transform_2(%arg0: i32) -> (i32, i32) {
    %c0_i32 = arith.constant 0 : i32
    %c0_i32_0 = arith.constant 0 : i32
    %c0_i32_1 = arith.constant 0 : i32
    return %c0_i32, %c0_i32_0 : i32, i32
  }
  func.func @transform_3(%arg0: i32) -> (i32, i32, i32, i32) {
    %c0_i32 = arith.constant 0 : i32
    %c0_i32_0 = arith.constant 0 : i32
    %c0_i32_1 = arith.constant 0 : i32
    %c0_i32_2 = arith.constant 0 : i32
    return %arg0, %c0_i32, %c0_i32_0, %c0_i32_1 : i32, i32, i32, i32
  }
}

</mosaic_0001>

<llo_original>
// kernel: tpu_custom_call.1
$region0: #{tpu_custom_call.1}
  #allocation0 [shape = 'u32[]', space=smem, size = 0x4, offset = 0x4, fixed_abs, tag = 'smem constant byte address 0x4 - core index']
  #allocation1 [shape = 'u32[144,128]{1,0:T(1,128)}', space=vmem, size = 0x12000, scoped, tag = 'internal scratch']
  %s0 = inlined_call_operand.vmem [shape: f32[2,10,17,12], index: 0, kind: input, shape index: {}]
  %s1 = inlined_call_operand.vmem [shape: f32[2,2,12,8], index: 1, kind: input, shape index: {}]
  %s2 = inlined_call_operand.vmem [shape: f32[1,8], index: 2, kind: input, shape index: {}]
  %s3 = inlined_call_operand.vmem [shape: f32[2,9,16,8], index: 3, kind: output, shape index: {}]
  %s4 = sld [smem:[#allocation0]]
  $region45: #{tpu_custom_call.1} parent=0
    _
  %s6 = ssub.s32 1, %s4
  %s7 = scalar_select 0, %s6, %s4
  loop: start=0, step=1, limit=4
  $region2: #{tpu_custom_call.1} parent=0 // loop_pre_header
    _
  $region3: #{tpu_custom_call.1} parent=0 // loop_header
    %s9 = sphi 0, %s13
    %p10 = scmp.ge.s32.totalorder %s9, 4
    %s19 = sphi 0, %s21
    %s22 = sphi 0, %s19
    %s23 = sphi 0, %s22
    %s39 = sphi 0, %s23
    %s43 = sphi 0, %s43
    %s45 = sphi 0, %s43
    %s46 = sphi 0, %s45
    %s60 = sphi 0, %s46
    %s64 = sphi 0, %s64
    %s66 = sphi 0, %s64
    %s67 = sphi 0, %s66
    %s81 = sphi 0, %s67
    %s87 = sphi 0, %s89
    %s90 = sphi 0, %s87
    %s91 = sphi 0, %s90
    %s107 = sphi 0, %s91
  $region4: #{tpu_custom_call.1} parent=0 // loop_header_branch
    %12 = sbr.rel (%p10) target = $region8
  $region5: #{tpu_custom_call.1} parent=0 // loop_body
    %s14 = ssub.s32 %s9, 1
    %s15 = ssub.s32 %s9, 2
    %s16 = sadd.s32 %s9, 1
    %s17 = ssub.s32 %s9, %s16
    %p18 = scmp.eq.s32.totalorder %s17, 0
    %s20 = sadd.s32 %s19, 1
    %s21 = scalar_select %p18, %s19, %s20
    %p24 = pneg %p18
    %p25 = scmp.eq.s32.totalorder %s9, 1
    %p26 = por %p24, %p25
    %p27 = scmp.ne.s32.totalorder %s19, %s22
    %p28 = scmp.eq.s32.totalorder %s9, 0
    %p29 = por %p27, %p28
    %p30 = scmp.ne.s32.totalorder %s19, %s22
    %p31 = scmp.eq.s32.totalorder %s14, 1
    %p32 = por %p30, %p31
    %p33 = scmp.ne.s32.totalorder %s22, %s23
    %p34 = scmp.eq.s32.totalorder %s14, 0
    %p35 = por %p33, %p34
    %p36 = scmp.ne.s32.totalorder %s22, %s23
    %p37 = scmp.eq.s32.totalorder %s15, 1
    %p38 = por %p36, %p37
    %p40 = scmp.ne.s32.totalorder %s23, %s39
    %p41 = scmp.eq.s32.totalorder %s15, 0
    %p42 = por %p40, %p41
    %s44 = sadd.s32 %s43, 1
    %p47 = scmp.eq.s32.totalorder %s9, 1
    %p48 = scmp.ne.s32.totalorder %s43, %s45
    %p49 = scmp.eq.s32.totalorder %s9, 0
    %p50 = por %p48, %p49
    %p51 = scmp.ne.s32.totalorder %s43, %s45
    %p52 = scmp.eq.s32.totalorder %s14, 1
    %p53 = por %p51, %p52
    %p54 = scmp.ne.s32.totalorder %s45, %s46
    %p55 = scmp.eq.s32.totalorder %s14, 0
    %p56 = por %p54, %p55
    %p57 = scmp.ne.s32.totalorder %s45, %s46
    %p58 = scmp.eq.s32.totalorder %s15, 1
    %p59 = por %p57, %p58
    %p61 = scmp.ne.s32.totalorder %s46, %s60
    %p62 = scmp.eq.s32.totalorder %s15, 0
    %p63 = por %p61, %p62
    %s65 = sadd.s32 %s64, 1
    %p68 = scmp.eq.s32.totalorder %s9, 1
    %p69 = scmp.ne.s32.totalorder %s64, %s66
    %p70 = scmp.eq.s32.totalorder %s9, 0
    %p71 = por %p69, %p70
    %p72 = scmp.ne.s32.totalorder %s64, %s66
    %p73 = scmp.eq.s32.totalorder %s14, 1
    %p74 = por %p72, %p73
    %p75 = scmp.ne.s32.totalorder %s66, %s67
    %p76 = scmp.eq.s32.totalorder %s14, 0
    %p77 = por %p75, %p76
    %p78 = scmp.ne.s32.totalorder %s66, %s67
    %p79 = scmp.eq.s32.totalorder %s15, 1
    %p80 = por %p78, %p79
    %p82 = scmp.ne.s32.totalorder %s67, %s81
    %p83 = scmp.eq.s32.totalorder %s15, 0
    %p84 = por %p82, %p83
    %s85 = ssub.s32 %s9, %s16
    %p86 = scmp.eq.s32.totalorder %s85, 0
    %s88 = sadd.s32 %s87, 1
    %s89 = scalar_select %p86, %s87, %s88
    %p92 = pneg %p86
    %p93 = scmp.eq.s32.totalorder %s9, 1
    %p94 = por %p92, %p93
    %p95 = scmp.ne.s32.totalorder %s87, %s90
    %p96 = scmp.eq.s32.totalorder %s9, 0
    %p97 = por %p95, %p96
    %p98 = scmp.ne.s32.totalorder %s87, %s90
    %p99 = scmp.eq.s32.totalorder %s14, 1
    %p100 = por %p98, %p99
    %p101 = scmp.ne.s32.totalorder %s90, %s91
    %p102 = scmp.eq.s32.totalorder %s14, 0
    %p103 = por %p101, %p102
    %p104 = scmp.ne.s32.totalorder %s90, %s91
    %p105 = scmp.eq.s32.totalorder %s15, 1
    %p106 = por %p104, %p105
    %p108 = scmp.ne.s32.totalorder %s91, %s107
    %p109 = scmp.eq.s32.totalorder %s15, 0
    %p110 = por %p108, %p109
    %p111 = scmp.le.s32.totalorder 1, %s9
    %p112 = scmp.lt.s32.totalorder %s9, 3
    %p113 = pnand %p111, %p112
    %p114 = pneg %p113
    // Predicated region
    $region9: #{tpu_custom_call.1} parent=5 // pred_check
      _
    $region10: #{tpu_custom_call.1} parent=5 // pred_check_branch
      %116 = sbr.rel (%p113) target = $region12
    $region11: #{tpu_custom_call.1} parent=5 // pred_region
      %s117 = ssub.s32 %s9, 1
      // Predicated region
      $region13: #{tpu_custom_call.1} parent=11 // pred_check
        %p118 = pneg %p56
      $region14: #{tpu_custom_call.1} parent=11 // pred_check_branch
        %120 = sbr.rel (%p118) target = $region16
      $region15: #{tpu_custom_call.1} parent=11 // pred_region
        _
      $region16: #{tpu_custom_call.1} parent=11 // pred_fallthru
        _
      // Predicated region
      $region17: #{tpu_custom_call.1} parent=11 // pred_check
        %p121 = pneg %p77
      $region18: #{tpu_custom_call.1} parent=11 // pred_check_branch
        %123 = sbr.rel (%p121) target = $region20
      $region19: #{tpu_custom_call.1} parent=11 // pred_region
        _
      $region20: #{tpu_custom_call.1} parent=11 // pred_fallthru
        _
    $region12: #{tpu_custom_call.1} parent=5 // pred_fallthru
      _
    %p124 = scmp.lt.s32.totalorder %s9, 2
    // Predicated region
    $region21: #{tpu_custom_call.1} parent=5 // pred_check
      %p125 = pneg %p124
    $region22: #{tpu_custom_call.1} parent=5 // pred_check_branch
      %127 = sbr.rel (%p125) target = $region24
    $region23: #{tpu_custom_call.1} parent=5 // pred_region
      // Predicated region
      $region25: #{tpu_custom_call.1} parent=23 // pred_check
        %p128 = pneg %p29
      $region26: #{tpu_custom_call.1} parent=23 // pred_check_branch
        %130 = sbr.rel (%p128) target = $region28
      $region27: #{tpu_custom_call.1} parent=23 // pred_region
        %p131 = scmp.lt.s32.totalorder %s9, 1
        %s132 = scalar_select %p131, %s9, 1
        %s133 = smul.addr %s132, 30
        %s134 = smul.addr %s133, 8
        %s135 = scalar_lea.vmem %s0, %s134
      $region28: #{tpu_custom_call.1} parent=23 // pred_fallthru
        _
    $region24: #{tpu_custom_call.1} parent=5 // pred_fallthru
      _
    %p136 = scmp.le.s32.totalorder 1, %s9
    %p137 = scmp.lt.s32.totalorder %s9, 3
    %p138 = pnand %p136, %p137
    %p139 = pneg %p138
    // Predicated region
    $region29: #{tpu_custom_call.1} parent=5 // pred_check
      _
    $region30: #{tpu_custom_call.1} parent=5 // pred_check_branch
      %141 = sbr.rel (%p138) target = $region32
    $region31: #{tpu_custom_call.1} parent=5 // pred_region
      %s142 = ssub.s32 %s9, 1
      %p143 = scmp.lt.s32.totalorder %s14, 1
      %s144 = scalar_select %p143, %s14, 1
      %s145 = smul.addr %s144, 30
      %s146 = smul.addr %s145, 8
      %s147 = scalar_lea.vmem %s0, %s146
      %p148 = pneg %p35
      %p149 = pneg %p32
      %p150 = pneg %p56
      %p151 = pneg %p53
      %p152 = pneg %p77
      %p153 = pneg %p74
      %p154 = pneg %p103
      %p155 = pneg %p100
      %p156 = scmp.lt.s32.totalorder %s14, 1
      %s157 = scalar_select %p156, %s14, 1
      %s158 = smul.addr %s157, 18
      %s159 = smul.addr %s158, 8
      %s160 = scalar_lea.vmem %s3, %s159
      %p161 = scmp.lt.s32.totalorder %s14, 1
      %s162 = scalar_select %p161, %s14, 1
      %s163 = smul.addr %s162, 30
      %s164 = smul.addr %s163, 8
      %s165 = scalar_lea.vmem %s0, %s164
      %p166 = scmp.lt.s32.totalorder %s14, 1
      %s167 = scalar_select %p166, %s14, 1
      %s168 = smul.addr %s167, 18
      %s169 = smul.addr %s168, 8
      %s170 = scalar_lea.vmem %s3, %s169
      %v171 = vld [vmem:[%s2] sm:$0x1]
      %v173 = vlaneseq
      %v174 = vshrl.u32 %v173, 7
      %v175 = vsub.s32 0, %v174
      %v176 = vrot.slane %v171, %v175
      %v178 = vadd.f32 %v176, 0.0
      %v179 = vld [vmem:[%s165] sm:$0xff]
      %v180 = vld [vmem:[%s165 + $0x8] sm:$0xff]
      %v181 = vld [vmem:[%s165 + $0x18] sm:$0xff]
      %v182 = vld [vmem:[%s165 + $0x20] sm:$0xff]
      %v183 = vld [vmem:[%s165 + $0x30] sm:$0xff]
      %v184 = vld [vmem:[%s165 + $0x38] sm:$0xff]
      %v185 = vld [vmem:[%s165 + $0x48] sm:$0xff]
      %v186 = vld [vmem:[%s165 + $0x50] sm:$0xff]
      %v187 = vld [vmem:[%s165 + $0x60] sm:$0xff]
      %v188 = vld [vmem:[%s165 + $0x68] sm:$0xff]
      %v189 = vld [vmem:[%s165 + $0x78] sm:$0xff]
      %v190 = vld [vmem:[%s165 + $0x80] sm:$0xff]
      %v191 = vld [vmem:[%s165 + $0x90] sm:$0xff]
      %v192 = vld [vmem:[%s165 + $0x98] sm:$0xff]
      %v193 = vld [vmem:[%s165 + $0xa8] sm:$0xff]
      %v194 = vld [vmem:[%s165 + $0xb0] sm:$0xff]
      %v195 = vld [vmem:[%s165 + $0xc0] sm:$0xff]
      %v196 = vld [vmem:[%s165 + $0xc8] sm:$0xff]
      %v197 = vld [vmem:[%s1] sm:$0xff]
      %v198 = vld [vmem:[%s1 + $0x8] sm:$0xf]
      %vm199 = vcmask 97280
      %v201 = vsel %vm199, %v179, 0
      %v204 = vsel %vm199, %v180, 0
      %v207 = vsel %vm199, %v181, 0
      %v210 = vsel %vm199, %v182, 0
      %v213 = vsel %vm199, %v183, 0
      %v216 = vsel %vm199, %v184, 0
      %v219 = vsel %vm199, %v185, 0
      %v222 = vsel %vm199, %v186, 0
      %v225 = vsel %vm199, %v187, 0
      %v228 = vsel %vm199, %v188, 0
      %v231 = vsel %vm199, %v189, 0
      %v234 = vsel %vm199, %v190, 0
      %v237 = vsel %vm199, %v191, 0
      %v240 = vsel %vm199, %v192, 0
      %v243 = vsel %vm199, %v193, 0
      %v246 = vsel %vm199, %v194, 0
      %v249 = vsel %vm199, %v195, 0
      %v252 = vsel %vm199, %v196, 0
      %vm254 = vcmask 1043456
      %v256 = vsel %vm254, %v198, 0
      %258 = vmatprep.subr.mxu0 0.0
      %259 = vmatpush1.msra.mxu0 0.0
      %260 = vmatprep.subr.mxu0 0.0
      %261 = vmatpush1.msra.mxu0 0.0
      %262 = vmatprep.subr.mxu0 0.0
      %263 = vmatpush1.msra.mxu0 0.0
      %264 = vmatprep.subr.mxu0 0.0
      %265 = vmatpush1.msra.mxu0 0.0
      %266 = vmatprep.subr.mxu0 0.0
      %267 = vmatpush1.msra.mxu0 0.0
      %268 = vmatprep.subr.mxu0 0.0
      %269 = vmatpush1.msra.mxu0 0.0
      %270 = vmatprep.subr.mxu0 0.0
      %271 = vmatpush1.msra.mxu0 0.0
      %272 = vmatprep.subr.mxu0 0.0
      %273 = vmatpush1.msra.mxu0 0.0
      %274 = vmatprep.subr.mxu0 0.0
      %275 = vmatpush1.msra.mxu0 0.0
      %276 = vmatprep.subr.mxu0 0.0
      %277 = vmatpush1.msra.mxu0 0.0
      %278 = vmatprep.subr.mxu0 0.0
      %279 = vmatpush1.msra.mxu0 0.0
      %280 = vmatprep.subr.mxu0 0.0
      %281 = vmatpush1.msra.mxu0 0.0
      %282 = vmatprep.subr.mxu0 0.0
      %283 = vmatpush1.msra.mxu0 0.0
      %284 = vmatprep.subr.mxu0 0.0
      %285 = vmatpush1.msra.mxu0 0.0
      %286 = vmatprep.subr.mxu0 0.0
      %287 = vmatpush1.msra.mxu0 %v256
      %288 = vmatprep.subr.mxu0 0.0
      %289 = vmatpush1.msra.mxu0 %v197
      %290 = vmatprep.subr.mxu0 0.0
      %291 = vmatpush2.msra.mxu0 0.0
      %292 = vmatprep.subr.mxu0 0.0
      %293 = vmatpush2.msra.mxu0 0.0
      %294 = vmatprep.subr.mxu0 0.0
      %295 = vmatpush2.msra.mxu0 0.0
      %296 = vmatprep.subr.mxu0 0.0
      %297 = vmatpush2.msra.mxu0 0.0
      %298 = vmatprep.subr.mxu0 0.0
      %299 = vmatpush2.msra.mxu0 0.0
      %300 = vmatprep.subr.mxu0 0.0
      %301 = vmatpush2.msra.mxu0 0.0
      %302 = vmatprep.subr.mxu0 0.0
      %303 = vmatpush2.msra.mxu0 0.0
      %304 = vmatprep.subr.mxu0 0.0
      %305 = vmatpush2.msra.mxu0 0.0
      %306 = vmatprep.subr.mxu0 0.0
      %307 = vmatpush2.msra.mxu0 0.0
      %308 = vmatprep.subr.mxu0 0.0
      %309 = vmatpush2.msra.mxu0 0.0
      %310 = vmatprep.subr.mxu0 0.0
      %311 = vmatpush2.msra.mxu0 0.0
      %312 = vmatprep.subr.mxu0 0.0
      %313 = vmatpush2.msra.mxu0 0.0
      %314 = vmatprep.subr.mxu0 0.0
      %315 = vmatpush2.msra.mxu0 0.0
      %316 = vmatprep.subr.mxu0 0.0
      %317 = vmatpush2.msra.mxu0 0.0
      %318 = vmatprep.subr.mxu0 0.0
      %319 = vmatpush2.msra.mxu0 0.0
      %320 = vmatprep.subr.mxu0 0.0
      %321 = vmatpush2.msra.mxu0 0.0
      %322 = vmatprep.mubr.f32.mxu0 0.0
      %323 = vmatmul.mubr.f32.gmra.mxu0 %v201
      %v324 = vpop.f32.mrf.mxu0
      %v325 = vadd.f32 0.0, %v324
      %v326 = vpop.f32.mrf.mxu0
      %327 = vmatprep.mubr.f32.mxu0 0.0
      %328 = vmatmul.mubr.f32.gmra.mxu0 %v204
      %v329 = vpop.f32.mrf.mxu0
      %v330 = vadd.f32 0.0, %v329
      %v331 = vpop.f32.mrf.mxu0
      %332 = vmatprep.mubr.f32.mxu0 0.0
      %333 = vmatmul.mubr.f32.gmra.mxu0 %v207
      %v334 = vpop.f32.mrf.mxu0
      %v335 = vadd.f32 0.0, %v334
      %v336 = vpop.f32.mrf.mxu0
      %337 = vmatprep.mubr.f32.mxu0 0.0
      %338 = vmatmul.mubr.f32.gmra.mxu0 %v210
      %v339 = vpop.f32.mrf.mxu0
      %v340 = vadd.f32 0.0, %v339
      %v341 = vpop.f32.mrf.mxu0
      %342 = vmatprep.mubr.f32.mxu0 0.0
      %343 = vmatmul.mubr.f32.gmra.mxu0 %v213
      %v344 = vpop.f32.mrf.mxu0
      %v345 = vadd.f32 0.0, %v344
      %v346 = vpop.f32.mrf.mxu0
      %347 = vmatprep.mubr.f32.mxu0 0.0
      %348 = vmatmul.mubr.f32.gmra.mxu0 %v216
      %v349 = vpop.f32.mrf.mxu0
      %v350 = vadd.f32 0.0, %v349
      %v351 = vpop.f32.mrf.mxu0
      %352 = vmatprep.mubr.f32.mxu0 0.0
      %353 = vmatmul.mubr.f32.gmra.mxu0 %v219
      %v354 = vpop.f32.mrf.mxu0
      %v355 = vadd.f32 0.0, %v354
      %v356 = vpop.f32.mrf.mxu0
      %357 = vmatprep.mubr.f32.mxu0 0.0
      %358 = vmatmul.mubr.f32.gmra.mxu0 %v222
      %v359 = vpop.f32.mrf.mxu0
      %v360 = vadd.f32 0.0, %v359
      %v361 = vpop.f32.mrf.mxu0
      %362 = vmatprep.mubr.f32.mxu0 0.0
      %363 = vmatmul.mubr.f32.gmra.mxu0 %v225
      %v364 = vpop.f32.mrf.mxu0
      %v365 = vadd.f32 0.0, %v364
      %v366 = vpop.f32.mrf.mxu0
      %367 = vmatprep.mubr.f32.mxu0 0.0
      %368 = vmatmul.mubr.f32.gmra.mxu0 %v228
      %v369 = vpop.f32.mrf.mxu0
      %v370 = vadd.f32 0.0, %v369
      %v371 = vpop.f32.mrf.mxu0
      %372 = vmatprep.mubr.f32.mxu0 0.0
      %373 = vmatmul.mubr.f32.gmra.mxu0 %v231
      %v374 = vpop.f32.mrf.mxu0
      %v375 = vadd.f32 0.0, %v374
      %v376 = vpop.f32.mrf.mxu0
      %377 = vmatprep.mubr.f32.mxu0 0.0
      %378 = vmatmul.mubr.f32.gmra.mxu0 %v234
      %v379 = vpop.f32.mrf.mxu0
      %v380 = vadd.f32 0.0, %v379
      %v381 = vpop.f32.mrf.mxu0
      %382 = vmatprep.mubr.f32.mxu0 0.0
      %383 = vmatmul.mubr.f32.gmra.mxu0 %v237
      %v384 = vpop.f32.mrf.mxu0
      %v385 = vadd.f32 0.0, %v384
      %v386 = vpop.f32.mrf.mxu0
      %387 = vmatprep.mubr.f32.mxu0 0.0
      %388 = vmatmul.mubr.f32.gmra.mxu0 %v240
      %v389 = vpop.f32.mrf.mxu0
      %v390 = vadd.f32 0.0, %v389
      %v391 = vpop.f32.mrf.mxu0
      %392 = vmatprep.mubr.f32.mxu0 0.0
      %393 = vmatmul.mubr.f32.gmra.mxu0 %v243
      %v394 = vpop.f32.mrf.mxu0
      %v395 = vadd.f32 0.0, %v394
      %v396 = vpop.f32.mrf.mxu0
      %397 = vmatprep.mubr.f32.mxu0 0.0
      %398 = vmatmul.mubr.f32.gmra.mxu0 %v246
      %v399 = vpop.f32.mrf.mxu0
      %v400 = vadd.f32 0.0, %v399
      %v401 = vpop.f32.mrf.mxu0
      %402 = vmatprep.mubr.f32.mxu0 0.0
      %403 = vmatmul.mubr.f32.gmra.mxu0 %v249
      %v404 = vpop.f32.mrf.mxu0
      %v405 = vadd.f32 0.0, %v404
      %v406 = vpop.f32.mrf.mxu0
      %407 = vmatprep.mubr.f32.mxu0 0.0
      %408 = vmatmul.mubr.f32.gmra.mxu0 %v252
      %v409 = vpop.f32.mrf.mxu0
      %v410 = vadd.f32 0.0, %v409
      %v411 = vpop.f32.mrf.mxu0
      %412 = vdwg.mxu0
      %v413 = vadd.f32 %v178, %v325
      %v414 = vadd.f32 %v178, %v330
      %v415 = vadd.f32 %v178, %v335
      %v416 = vadd.f32 %v178, %v340
      %v417 = vadd.f32 %v178, %v345
      %v418 = vadd.f32 %v178, %v350
      %v419 = vadd.f32 %v178, %v355
      %v420 = vadd.f32 %v178, %v360
      %v421 = vadd.f32 %v178, %v365
      %v422 = vadd.f32 %v178, %v370
      %v423 = vadd.f32 %v178, %v375
      %v424 = vadd.f32 %v178, %v380
      %v425 = vadd.f32 %v178, %v385
      %v426 = vadd.f32 %v178, %v390
      %v427 = vadd.f32 %v178, %v395
      %v428 = vadd.f32 %v178, %v400
      %v429 = vadd.f32 %v178, %v405
      %v430 = vadd.f32 %v178, %v410
      %v431 = vld [vmem:[%s165 + $0x1] sm:$0xff]
      %v432 = vld [vmem:[%s165 + $0x9] sm:$0xff]
      %v433 = vld [vmem:[%s165 + $0x19] sm:$0xff]
      %v434 = vld [vmem:[%s165 + $0x21] sm:$0xff]
      %v435 = vld [vmem:[%s165 + $0x31] sm:$0xff]
      %v436 = vld [vmem:[%s165 + $0x39] sm:$0xff]
      %v437 = vld [vmem:[%s165 + $0x49] sm:$0xff]
      %v438 = vld [vmem:[%s165 + $0x51] sm:$0xff]
      %v439 = vld [vmem:[%s165 + $0x61] sm:$0xff]
      %v440 = vld [vmem:[%s165 + $0x69] sm:$0xff]
      %v441 = vld [vmem:[%s165 + $0x79] sm:$0xff]
      %v442 = vld [vmem:[%s165 + $0x81] sm:$0xff]
      %v443 = vld [vmem:[%s165 + $0x91] sm:$0xff]
      %v444 = vld [vmem:[%s165 + $0x99] sm:$0xff]
      %v445 = vld [vmem:[%s165 + $0xa9] sm:$0xff]
      %v446 = vld [vmem:[%s165 + $0xb1] sm:$0xff]
      %v447 = vld [vmem:[%s165 + $0xc1] sm:$0xff]
      %v448 = vld [vmem:[%s165 + $0xc9] sm:$0xff]
      %s449 = scalar_lea.vmem %s1, 16
      %v450 = vld [vmem:[%s449] sm:$0xff]
      %v451 = vld [vmem:[%s449 + $0x8] sm:$0xf]
      %v453 = vsel %vm199, %v431, 0
      %v456 = vsel %vm199, %v432, 0
      %v459 = vsel %vm199, %v433, 0
      %v462 = vsel %vm199, %v434, 0
      %v465 = vsel %vm199, %v435, 0
      %v468 = vsel %vm199, %v436, 0
      %v471 = vsel %vm199, %v437, 0
      %v474 = vsel %vm199, %v438, 0
      %v477 = vsel %vm199, %v439, 0
      %v480 = vsel %vm199, %v440, 0
      %v483 = vsel %vm199, %v441, 0
      %v486 = vsel %vm199, %v442, 0
      %v489 = vsel %vm199, %v443, 0
      %v492 = vsel %vm199, %v444, 0
      %v495 = vsel %vm199, %v445, 0
      %v498 = vsel %vm199, %v446, 0
      %v501 = vsel %vm199, %v447, 0
      %v504 = vsel %vm199, %v448, 0
      %v507 = vsel %vm254, %v451, 0
      %509 = vmatprep.subr.mxu0 0.0
      %510 = vmatpush1.msra.mxu0 0.0
      %511 = vmatprep.subr.mxu0 0.0
      %512 = vmatpush1.msra.mxu0 0.0
      %513 = vmatprep.subr.mxu0 0.0
      %514 = vmatpush1.msra.mxu0 0.0
      %515 = vmatprep.subr.mxu0 0.0
      %516 = vmatpush1.msra.mxu0 0.0
      %517 = vmatprep.subr.mxu0 0.0
      %518 = vmatpush1.msra.mxu0 0.0
      %519 = vmatprep.subr.mxu0 0.0
      %520 = vmatpush1.msra.mxu0 0.0
      %521 = vmatprep.subr.mxu0 0.0
      %522 = vmatpush1.msra.mxu0 0.0
      %523 = vmatprep.subr.mxu0 0.0
      %524 = vmatpush1.msra.mxu0 0.0
      %525 = vmatprep.subr.mxu0 0.0
      %526 = vmatpush1.msra.mxu0 0.0
      %527 = vmatprep.subr.mxu0 0.0
      %528 = vmatpush1.msra.mxu0 0.0
      %529 = vmatprep.subr.mxu0 0.0
      %530 = vmatpush1.msra.mxu0 0.0
      %531 = vmatprep.subr.mxu0 0.0
      %532 = vmatpush1.msra.mxu0 0.0
      %533 = vmatprep.subr.mxu0 0.0
      %534 = vmatpush1.msra.mxu0 0.0
      %535 = vmatprep.subr.mxu0 0.0
      %536 = vmatpush1.msra.mxu0 0.0
      %537 = vmatprep.subr.mxu0 0.0
      %538 = vmatpush1.msra.mxu0 %v507
      %539 = vmatprep.subr.mxu0 0.0
      %540 = vmatpush1.msra.mxu0 %v450
      %541 = vmatprep.subr.mxu0 0.0
      %542 = vmatpush2.msra.mxu0 0.0
      %543 = vmatprep.subr.mxu0 0.0
      %544 = vmatpush2.msra.mxu0 0.0
      %545 = vmatprep.subr.mxu0 0.0
      %546 = vmatpush2.msra.mxu0 0.0
      %547 = vmatprep.subr.mxu0 0.0
      %548 = vmatpush2.msra.mxu0 0.0
      %549 = vmatprep.subr.mxu0 0.0
      %550 = vmatpush2.msra.mxu0 0.0
      %551 = vmatprep.subr.mxu0 0.0
      %552 = vmatpush2.msra.mxu0 0.0
      %553 = vmatprep.subr.mxu0 0.0
      %554 = vmatpush2.msra.mxu0 0.0
      %555 = vmatprep.subr.mxu0 0.0
      %556 = vmatpush2.msra.mxu0 0.0
      %557 = vmatprep.subr.mxu0 0.0
      %558 = vmatpush2.msra.mxu0 0.0
      %559 = vmatprep.subr.mxu0 0.0
      %560 = vmatpush2.msra.mxu0 0.0
      %561 = vmatprep.subr.mxu0 0.0
      %562 = vmatpush2.msra.mxu0 0.0
      %563 = vmatprep.subr.mxu0 0.0
      %564 = vmatpush2.msra.mxu0 0.0
      %565 = vmatprep.subr.mxu0 0.0
      %566 = vmatpush2.msra.mxu0 0.0
      %567 = vmatprep.subr.mxu0 0.0
      %568 = vmatpush2.msra.mxu0 0.0
      %569 = vmatprep.subr.mxu0 0.0
      %570 = vmatpush2.msra.mxu0 0.0
      %571 = vmatprep.subr.mxu0 0.0
      %572 = vmatpush2.msra.mxu0 0.0
      %573 = vmatprep.mubr.f32.mxu0 0.0
      %574 = vmatmul.mubr.f32.gmra.mxu0 %v453
      %v575 = vpop.f32.mrf.mxu0
      %v576 = vadd.f32 0.0, %v575
      %v577 = vpop.f32.mrf.mxu0
      %578 = vmatprep.mubr.f32.mxu0 0.0
      %579 = vmatmul.mubr.f32.gmra.mxu0 %v456
      %v580 = vpop.f32.mrf.mxu0
      %v581 = vadd.f32 0.0, %v580
      %v582 = vpop.f32.mrf.mxu0
      %583 = vmatprep.mubr.f32.mxu0 0.0
      %584 = vmatmul.mubr.f32.gmra.mxu0 %v459
      %v585 = vpop.f32.mrf.mxu0
      %v586 = vadd.f32 0.0, %v585
      %v587 = vpop.f32.mrf.mxu0
      %588 = vmatprep.mubr.f32.mxu0 0.0
      %589 = vmatmul.mubr.f32.gmra.mxu0 %v462
      %v590 = vpop.f32.mrf.mxu0
      %v591 = vadd.f32 0.0, %v590
      %v592 = vpop.f32.mrf.mxu0
      %593 = vmatprep.mubr.f32.mxu0 0.0
      %594 = vmatmul.mubr.f32.gmra.mxu0 %v465
      %v595 = vpop.f32.mrf.mxu0
      %v596 = vadd.f32 0.0, %v595
      %v597 = vpop.f32.mrf.mxu0
      %598 = vmatprep.mubr.f32.mxu0 0.0
      %599 = vmatmul.mubr.f32.gmra.mxu0 %v468
      %v600 = vpop.f32.mrf.mxu0
      %v601 = vadd.f32 0.0, %v600
      %v602 = vpop.f32.mrf.mxu0
      %603 = vmatprep.mubr.f32.mxu0 0.0
      %604 = vmatmul.mubr.f32.gmra.mxu0 %v471
      %v605 = vpop.f32.mrf.mxu0
      %v606 = vadd.f32 0.0, %v605
      %v607 = vpop.f32.mrf.mxu0
      %608 = vmatprep.mubr.f32.mxu0 0.0
      %609 = vmatmul.mubr.f32.gmra.mxu0 %v474
      %v610 = vpop.f32.mrf.mxu0
      %v611 = vadd.f32 0.0, %v610
      %v612 = vpop.f32.mrf.mxu0
      %613 = vmatprep.mubr.f32.mxu0 0.0
      %614 = vmatmul.mubr.f32.gmra.mxu0 %v477
      %v615 = vpop.f32.mrf.mxu0
      %v616 = vadd.f32 0.0, %v615
      %v617 = vpop.f32.mrf.mxu0
      %618 = vmatprep.mubr.f32.mxu0 0.0
      %619 = vmatmul.mubr.f32.gmra.mxu0 %v480
      %v620 = vpop.f32.mrf.mxu0
      %v621 = vadd.f32 0.0, %v620
      %v622 = vpop.f32.mrf.mxu0
      %623 = vmatprep.mubr.f32.mxu0 0.0
      %624 = vmatmul.mubr.f32.gmra.mxu0 %v483
      %v625 = vpop.f32.mrf.mxu0
      %v626 = vadd.f32 0.0, %v625
      %v627 = vpop.f32.mrf.mxu0
      %628 = vmatprep.mubr.f32.mxu0 0.0
      %629 = vmatmul.mubr.f32.gmra.mxu0 %v486
      %v630 = vpop.f32.mrf.mxu0
      %v631 = vadd.f32 0.0, %v630
      %v632 = vpop.f32.mrf.mxu0
      %633 = vmatprep.mubr.f32.mxu0 0.0
      %634 = vmatmul.mubr.f32.gmra.mxu0 %v489
      %v635 = vpop.f32.mrf.mxu0
      %v636 = vadd.f32 0.0, %v635
      %v637 = vpop.f32.mrf.mxu0
      %638 = vmatprep.mubr.f32.mxu0 0.0
      %639 = vmatmul.mubr.f32.gmra.mxu0 %v492
      %v640 = vpop.f32.mrf.mxu0
      %v641 = vadd.f32 0.0, %v640
      %v642 = vpop.f32.mrf.mxu0
      %643 = vmatprep.mubr.f32.mxu0 0.0
      %644 = vmatmul.mubr.f32.gmra.mxu0 %v495
      %v645 = vpop.f32.mrf.mxu0
      %v646 = vadd.f32 0.0, %v645
      %v647 = vpop.f32.mrf.mxu0
      %648 = vmatprep.mubr.f32.mxu0 0.0
      %649 = vmatmul.mubr.f32.gmra.mxu0 %v498
      %v650 = vpop.f32.mrf.mxu0
      %v651 = vadd.f32 0.0, %v650
      %v652 = vpop.f32.mrf.mxu0
      %653 = vmatprep.mubr.f32.mxu0 0.0
      %654 = vmatmul.mubr.f32.gmra.mxu0 %v501
      %v655 = vpop.f32.mrf.mxu0
      %v656 = vadd.f32 0.0, %v655
      %v657 = vpop.f32.mrf.mxu0
      %658 = vmatprep.mubr.f32.mxu0 0.0
      %659 = vmatmul.mubr.f32.gmra.mxu0 %v504
      %v660 = vpop.f32.mrf.mxu0
      %v661 = vadd.f32 0.0, %v660
      %v662 = vpop.f32.mrf.mxu0
      %663 = vdwg.mxu0
      %v664 = vadd.f32 %v413, %v576
      %v665 = vadd.f32 %v414, %v581
      %v666 = vadd.f32 %v415, %v586
      %v667 = vadd.f32 %v416, %v591
      %v668 = vadd.f32 %v417, %v596
      %v669 = vadd.f32 %v418, %v601
      %v670 = vadd.f32 %v419, %v606
      %v671 = vadd.f32 %v420, %v611
      %v672 = vadd.f32 %v421, %v616
      %v673 = vadd.f32 %v422, %v621
      %v674 = vadd.f32 %v423, %v626
      %v675 = vadd.f32 %v424, %v631
      %v676 = vadd.f32 %v425, %v636
      %v677 = vadd.f32 %v426, %v641
      %v678 = vadd.f32 %v427, %v646
      %v679 = vadd.f32 %v428, %v651
      %v680 = vadd.f32 %v429, %v656
      %v681 = vadd.f32 %v430, %v661
      %s682 = scalar_lea.vmem %s165, 24
      %v683 = vld [vmem:[%s682] sm:$0xff]
      %v684 = vld [vmem:[%s682 + $0x8] sm:$0xff]
      %v685 = vld [vmem:[%s682 + $0x18] sm:$0xff]
      %v686 = vld [vmem:[%s682 + $0x20] sm:$0xff]
      %v687 = vld [vmem:[%s682 + $0x30] sm:$0xff]
      %v688 = vld [vmem:[%s682 + $0x38] sm:$0xff]
      %v689 = vld [vmem:[%s682 + $0x48] sm:$0xff]
      %v690 = vld [vmem:[%s682 + $0x50] sm:$0xff]
      %v691 = vld [vmem:[%s682 + $0x60] sm:$0xff]
      %v692 = vld [vmem:[%s682 + $0x68] sm:$0xff]
      %v693 = vld [vmem:[%s682 + $0x78] sm:$0xff]
      %v694 = vld [vmem:[%s682 + $0x80] sm:$0xff]
      %v695 = vld [vmem:[%s682 + $0x90] sm:$0xff]
      %v696 = vld [vmem:[%s682 + $0x98] sm:$0xff]
      %v697 = vld [vmem:[%s682 + $0xa8] sm:$0xff]
      %v698 = vld [vmem:[%s682 + $0xb0] sm:$0xff]
      %v699 = vld [vmem:[%s682 + $0xc0] sm:$0xff]
      %v700 = vld [vmem:[%s682 + $0xc8] sm:$0xff]
      %s701 = scalar_lea.vmem %s1, 32
      %v702 = vld [vmem:[%s701] sm:$0xff]
      %v703 = vld [vmem:[%s701 + $0x8] sm:$0xf]
      %v705 = vsel %vm199, %v683, 0
      %v708 = vsel %vm199, %v684, 0
      %v711 = vsel %vm199, %v685, 0
      %v714 = vsel %vm199, %v686, 0
      %v717 = vsel %vm199, %v687, 0
      %v720 = vsel %vm199, %v688, 0
      %v723 = vsel %vm199, %v689, 0
      %v726 = vsel %vm199, %v690, 0
      %v729 = vsel %vm199, %v691, 0
      %v732 = vsel %vm199, %v692, 0
      %v735 = vsel %vm199, %v693, 0
      %v738 = vsel %vm199, %v694, 0
      %v741 = vsel %vm199, %v695, 0
      %v744 = vsel %vm199, %v696, 0
      %v747 = vsel %vm199, %v697, 0
      %v750 = vsel %vm199, %v698, 0
      %v753 = vsel %vm199, %v699, 0
      %v756 = vsel %vm199, %v700, 0
      %v759 = vsel %vm254, %v703, 0
      %761 = vmatprep.subr.mxu0 0.0
      %762 = vmatpush1.msra.mxu0 0.0
      %763 = vmatprep.subr.mxu0 0.0
      %764 = vmatpush1.msra.mxu0 0.0
      %765 = vmatprep.subr.mxu0 0.0
      %766 = vmatpush1.msra.mxu0 0.0
      %767 = vmatprep.subr.mxu0 0.0
      %768 = vmatpush1.msra.mxu0 0.0
      %769 = vmatprep.subr.mxu0 0.0
      %770 = vmatpush1.msra.mxu0 0.0
      %771 = vmatprep.subr.mxu0 0.0
      %772 = vmatpush1.msra.mxu0 0.0
      %773 = vmatprep.subr.mxu0 0.0
      %774 = vmatpush1.msra.mxu0 0.0
      %775 = vmatprep.subr.mxu0 0.0
      %776 = vmatpush1.msra.mxu0 0.0
      %777 = vmatprep.subr.mxu0 0.0
      %778 = vmatpush1.msra.mxu0 0.0
      %779 = vmatprep.subr.mxu0 0.0
      %780 = vmatpush1.msra.mxu0 0.0
      %781 = vmatprep.subr.mxu0 0.0
      %782 = vmatpush1.msra.mxu0 0.0
      %783 = vmatprep.subr.mxu0 0.0
      %784 = vmatpush1.msra.mxu0 0.0
      %785 = vmatprep.subr.mxu0 0.0
      %786 = vmatpush1.msra.mxu0 0.0
      %787 = vmatprep.subr.mxu0 0.0
      %788 = vmatpush1.msra.mxu0 0.0
      %789 = vmatprep.subr.mxu0 0.0
      %790 = vmatpush1.msra.mxu0 %v759
      %791 = vmatprep.subr.mxu0 0.0
      %792 = vmatpush1.msra.mxu0 %v702
      %793 = vmatprep.subr.mxu0 0.0
      %794 = vmatpush2.msra.mxu0 0.0
      %795 = vmatprep.subr.mxu0 0.0
      %796 = vmatpush2.msra.mxu0 0.0
      %797 = vmatprep.subr.mxu0 0.0
      %798 = vmatpush2.msra.mxu0 0.0
      %799 = vmatprep.subr.mxu0 0.0
      %800 = vmatpush2.msra.mxu0 0.0
      %801 = vmatprep.subr.mxu0 0.0
      %802 = vmatpush2.msra.mxu0 0.0
      %803 = vmatprep.subr.mxu0 0.0
      %804 = vmatpush2.msra.mxu0 0.0
      %805 = vmatprep.subr.mxu0 0.0
      %806 = vmatpush2.msra.mxu0 0.0
      %807 = vmatprep.subr.mxu0 0.0
      %808 = vmatpush2.msra.mxu0 0.0
      %809 = vmatprep.subr.mxu0 0.0
      %810 = vmatpush2.msra.mxu0 0.0
      %811 = vmatprep.subr.mxu0 0.0
      %812 = vmatpush2.msra.mxu0 0.0
      %813 = vmatprep.subr.mxu0 0.0
      %814 = vmatpush2.msra.mxu0 0.0
      %815 = vmatprep.subr.mxu0 0.0
      %816 = vmatpush2.msra.mxu0 0.0
      %817 = vmatprep.subr.mxu0 0.0
      %818 = vmatpush2.msra.mxu0 0.0
      %819 = vmatprep.subr.mxu0 0.0
      %820 = vmatpush2.msra.mxu0 0.0
      %821 = vmatprep.subr.mxu0 0.0
      %822 = vmatpush2.msra.mxu0 0.0
      %823 = vmatprep.subr.mxu0 0.0
      %824 = vmatpush2.msra.mxu0 0.0
      %825 = vmatprep.mubr.f32.mxu0 0.0
      %826 = vmatmul.mubr.f32.gmra.mxu0 %v705
      %v827 = vpop.f32.mrf.mxu0
      %v828 = vadd.f32 0.0, %v827
      %v829 = vpop.f32.mrf.mxu0
      %830 = vmatprep.mubr.f32.mxu0 0.0
      %831 = vmatmul.mubr.f32.gmra.mxu0 %v708
      %v832 = vpop.f32.mrf.mxu0
      %v833 = vadd.f32 0.0, %v832
      %v834 = vpop.f32.mrf.mxu0
      %835 = vmatprep.mubr.f32.mxu0 0.0
      %836 = vmatmul.mubr.f32.gmra.mxu0 %v711
      %v837 = vpop.f32.mrf.mxu0
      %v838 = vadd.f32 0.0, %v837
      %v839 = vpop.f32.mrf.mxu0
      %840 = vmatprep.mubr.f32.mxu0 0.0
      %841 = vmatmul.mubr.f32.gmra.mxu0 %v714
      %v842 = vpop.f32.mrf.mxu0
      %v843 = vadd.f32 0.0, %v842
      %v844 = vpop.f32.mrf.mxu0
      %845 = vmatprep.mubr.f32.mxu0 0.0
      %846 = vmatmul.mubr.f32.gmra.mxu0 %v717
      %v847 = vpop.f32.mrf.mxu0
      %v848 = vadd.f32 0.0, %v847
      %v849 = vpop.f32.mrf.mxu0
      %850 = vmatprep.mubr.f32.mxu0 0.0
      %851 = vmatmul.mubr.f32.gmra.mxu0 %v720
      %v852 = vpop.f32.mrf.mxu0
      %v853 = vadd.f32 0.0, %v852
      %v854 = vpop.f32.mrf.mxu0
      %855 = vmatprep.mubr.f32.mxu0 0.0
      %856 = vmatmul.mubr.f32.gmra.mxu0 %v723
      %v857 = vpop.f32.mrf.mxu0
      %v858 = vadd.f32 0.0, %v857
      %v859 = vpop.f32.mrf.mxu0
      %860 = vmatprep.mubr.f32.mxu0 0.0
      %861 = vmatmul.mubr.f32.gmra.mxu0 %v726
      %v862 = vpop.f32.mrf.mxu0
      %v863 = vadd.f32 0.0, %v862
      %v864 = vpop.f32.mrf.mxu0
      %865 = vmatprep.mubr.f32.mxu0 0.0
      %866 = vmatmul.mubr.f32.gmra.mxu0 %v729
      %v867 = vpop.f32.mrf.mxu0
      %v868 = vadd.f32 0.0, %v867
      %v869 = vpop.f32.mrf.mxu0
      %870 = vmatprep.mubr.f32.mxu0 0.0
      %871 = vmatmul.mubr.f32.gmra.mxu0 %v732
      %v872 = vpop.f32.mrf.mxu0
      %v873 = vadd.f32 0.0, %v872
      %v874 = vpop.f32.mrf.mxu0
      %875 = vmatprep.mubr.f32.mxu0 0.0
      %876 = vmatmul.mubr.f32.gmra.mxu0 %v735
      %v877 = vpop.f32.mrf.mxu0
      %v878 = vadd.f32 0.0, %v877
      %v879 = vpop.f32.mrf.mxu0
      %880 = vmatprep.mubr.f32.mxu0 0.0
      %881 = vmatmul.mubr.f32.gmra.mxu0 %v738
      %v882 = vpop.f32.mrf.mxu0
      %v883 = vadd.f32 0.0, %v882
      %v884 = vpop.f32.mrf.mxu0
      %885 = vmatprep.mubr.f32.mxu0 0.0
      %886 = vmatmul.mubr.f32.gmra.mxu0 %v741
      %v887 = vpop.f32.mrf.mxu0
      %v888 = vadd.f32 0.0, %v887
      %v889 = vpop.f32.mrf.mxu0
      %890 = vmatprep.mubr.f32.mxu0 0.0
      %891 = vmatmul.mubr.f32.gmra.mxu0 %v744
      %v892 = vpop.f32.mrf.mxu0
      %v893 = vadd.f32 0.0, %v892
      %v894 = vpop.f32.mrf.mxu0
      %895 = vmatprep.mubr.f32.mxu0 0.0
      %896 = vmatmul.mubr.f32.gmra.mxu0 %v747
      %v897 = vpop.f32.mrf.mxu0
      %v898 = vadd.f32 0.0, %v897
      %v899 = vpop.f32.mrf.mxu0
      %900 = vmatprep.mubr.f32.mxu0 0.0
      %901 = vmatmul.mubr.f32.gmra.mxu0 %v750
      %v902 = vpop.f32.mrf.mxu0
      %v903 = vadd.f32 0.0, %v902
      %v904 = vpop.f32.mrf.mxu0
      %905 = vmatprep.mubr.f32.mxu0 0.0
      %906 = vmatmul.mubr.f32.gmra.mxu0 %v753
      %v907 = vpop.f32.mrf.mxu0
      %v908 = vadd.f32 0.0, %v907
      %v909 = vpop.f32.mrf.mxu0
      %910 = vmatprep.mubr.f32.mxu0 0.0
      %911 = vmatmul.mubr.f32.gmra.mxu0 %v756
      %v912 = vpop.f32.mrf.mxu0
      %v913 = vadd.f32 0.0, %v912
      %v914 = vpop.f32.mrf.mxu0
      %915 = vdwg.mxu0
      %v916 = vadd.f32 %v664, %v828
      %v917 = vadd.f32 %v665, %v833
      %v918 = vadd.f32 %v666, %v838
      %v919 = vadd.f32 %v667, %v843
      %v920 = vadd.f32 %v668, %v848
      %v921 = vadd.f32 %v669, %v853
      %v922 = vadd.f32 %v670, %v858
      %v923 = vadd.f32 %v671, %v863
      %v924 = vadd.f32 %v672, %v868
      %v925 = vadd.f32 %v673, %v873
      %v926 = vadd.f32 %v674, %v878
      %v927 = vadd.f32 %v675, %v883
      %v928 = vadd.f32 %v676, %v888
      %v929 = vadd.f32 %v677, %v893
      %v930 = vadd.f32 %v678, %v898
      %v931 = vadd.f32 %v679, %v903
      %v932 = vadd.f32 %v680, %v908
      %v933 = vadd.f32 %v681, %v913
      %v934 = vld [vmem:[%s682 + $0x1] sm:$0xff]
      %v935 = vld [vmem:[%s682 + $0x9] sm:$0xff]
      %v936 = vld [vmem:[%s682 + $0x19] sm:$0xff]
      %v937 = vld [vmem:[%s682 + $0x21] sm:$0xff]
      %v938 = vld [vmem:[%s682 + $0x31] sm:$0xff]
      %v939 = vld [vmem:[%s682 + $0x39] sm:$0xff]
      %v940 = vld [vmem:[%s682 + $0x49] sm:$0xff]
      %v941 = vld [vmem:[%s682 + $0x51] sm:$0xff]
      %v942 = vld [vmem:[%s682 + $0x61] sm:$0xff]
      %v943 = vld [vmem:[%s682 + $0x69] sm:$0xff]
      %v944 = vld [vmem:[%s682 + $0x79] sm:$0xff]
      %v945 = vld [vmem:[%s682 + $0x81] sm:$0xff]
      %v946 = vld [vmem:[%s682 + $0x91] sm:$0xff]
      %v947 = vld [vmem:[%s682 + $0x99] sm:$0xff]
      %v948 = vld [vmem:[%s682 + $0xa9] sm:$0xff]
      %v949 = vld [vmem:[%s682 + $0xb1] sm:$0xff]
      %v950 = vld [vmem:[%s682 + $0xc1] sm:$0xff]
      %v951 = vld [vmem:[%s682 + $0xc9] sm:$0xff]
      %s952 = scalar_lea.vmem %s1, 48
      %v953 = vld [vmem:[%s952] sm:$0xff]
      %v954 = vld [vmem:[%s952 + $0x8] sm:$0xf]
      %v956 = vsel %vm199, %v934, 0
      %v959 = vsel %vm199, %v935, 0
      %v962 = vsel %vm199, %v936, 0
      %v965 = vsel %vm199, %v937, 0
      %v968 = vsel %vm199, %v938, 0
      %v971 = vsel %vm199, %v939, 0
      %v974 = vsel %vm199, %v940, 0
      %v977 = vsel %vm199, %v941, 0
      %v980 = vsel %vm199, %v942, 0
      %v983 = vsel %vm199, %v943, 0
      %v986 = vsel %vm199, %v944, 0
      %v989 = vsel %vm199, %v945, 0
      %v992 = vsel %vm199, %v946, 0
      %v995 = vsel %vm199, %v947, 0
      %v998 = vsel %vm199, %v948, 0
      %v1001 = vsel %vm199, %v949, 0
      %v1004 = vsel %vm199, %v950, 0
      %v1007 = vsel %vm199, %v951, 0
      %v1010 = vsel %vm254, %v954, 0
      %1012 = vmatprep.subr.mxu0 0.0
      %1013 = vmatpush1.msra.mxu0 0.0
      %1014 = vmatprep.subr.mxu0 0.0
      %1015 = vmatpush1.msra.mxu0 0.0
      %1016 = vmatprep.subr.mxu0 0.0
      %1017 = vmatpush1.msra.mxu0 0.0
      %1018 = vmatprep.subr.mxu0 0.0
      %1019 = vmatpush1.msra.mxu0 0.0
      %1020 = vmatprep.subr.mxu0 0.0
      %1021 = vmatpush1.msra.mxu0 0.0
      %1022 = vmatprep.subr.mxu0 0.0
      %1023 = vmatpush1.msra.mxu0 0.0
      %1024 = vmatprep.subr.mxu0 0.0
      %1025 = vmatpush1.msra.mxu0 0.0
      %1026 = vmatprep.subr.mxu0 0.0
      %1027 = vmatpush1.msra.mxu0 0.0
      %1028 = vmatprep.subr.mxu0 0.0
      %1029 = vmatpush1.msra.mxu0 0.0
      %1030 = vmatprep.subr.mxu0 0.0
      %1031 = vmatpush1.msra.mxu0 0.0
      %1032 = vmatprep.subr.mxu0 0.0
      %1033 = vmatpush1.msra.mxu0 0.0
      %1034 = vmatprep.subr.mxu0 0.0
      %1035 = vmatpush1.msra.mxu0 0.0
      %1036 = vmatprep.subr.mxu0 0.0
      %1037 = vmatpush1.msra.mxu0 0.0
      %1038 = vmatprep.subr.mxu0 0.0
      %1039 = vmatpush1.msra.mxu0 0.0
      %1040 = vmatprep.subr.mxu0 0.0
      %1041 = vmatpush1.msra.mxu0 %v1010
      %1042 = vmatprep.subr.mxu0 0.0
      %1043 = vmatpush1.msra.mxu0 %v953
      %1044 = vmatprep.subr.mxu0 0.0
      %1045 = vmatpush2.msra.mxu0 0.0
      %1046 = vmatprep.subr.mxu0 0.0
      %1047 = vmatpush2.msra.mxu0 0.0
      %1048 = vmatprep.subr.mxu0 0.0
      %1049 = vmatpush2.msra.mxu0 0.0
      %1050 = vmatprep.subr.mxu0 0.0
      %1051 = vmatpush2.msra.mxu0 0.0
      %1052 = vmatprep.subr.mxu0 0.0
      %1053 = vmatpush2.msra.mxu0 0.0
      %1054 = vmatprep.subr.mxu0 0.0
      %1055 = vmatpush2.msra.mxu0 0.0
      %1056 = vmatprep.subr.mxu0 0.0
      %1057 = vmatpush2.msra.mxu0 0.0
      %1058 = vmatprep.subr.mxu0 0.0
      %1059 = vmatpush2.msra.mxu0 0.0
      %1060 = vmatprep.subr.mxu0 0.0
      %1061 = vmatpush2.msra.mxu0 0.0
      %1062 = vmatprep.subr.mxu0 0.0
      %1063 = vmatpush2.msra.mxu0 0.0
      %1064 = vmatprep.subr.mxu0 0.0
      %1065 = vmatpush2.msra.mxu0 0.0
      %1066 = vmatprep.subr.mxu0 0.0
      %1067 = vmatpush2.msra.mxu0 0.0
      %1068 = vmatprep.subr.mxu0 0.0
      %1069 = vmatpush2.msra.mxu0 0.0
      %1070 = vmatprep.subr.mxu0 0.0
      %1071 = vmatpush2.msra.mxu0 0.0
      %1072 = vmatprep.subr.mxu0 0.0
      %1073 = vmatpush2.msra.mxu0 0.0
      %1074 = vmatprep.subr.mxu0 0.0
      %1075 = vmatpush2.msra.mxu0 0.0
      %1076 = vmatprep.mubr.f32.mxu0 0.0
      %1077 = vmatmul.mubr.f32.gmra.mxu0 %v956
      %v1078 = vpop.f32.mrf.mxu0
      %v1079 = vadd.f32 0.0, %v1078
      %v1080 = vpop.f32.mrf.mxu0
      %1081 = vmatprep.mubr.f32.mxu0 0.0
      %1082 = vmatmul.mubr.f32.gmra.mxu0 %v959
      %v1083 = vpop.f32.mrf.mxu0
      %v1084 = vadd.f32 0.0, %v1083
      %v1085 = vpop.f32.mrf.mxu0
      %1086 = vmatprep.mubr.f32.mxu0 0.0
      %1087 = vmatmul.mubr.f32.gmra.mxu0 %v962
      %v1088 = vpop.f32.mrf.mxu0
      %v1089 = vadd.f32 0.0, %v1088
      %v1090 = vpop.f32.mrf.mxu0
      %1091 = vmatprep.mubr.f32.mxu0 0.0
      %1092 = vmatmul.mubr.f32.gmra.mxu0 %v965
      %v1093 = vpop.f32.mrf.mxu0
      %v1094 = vadd.f32 0.0, %v1093
      %v1095 = vpop.f32.mrf.mxu0
      %1096 = vmatprep.mubr.f32.mxu0 0.0
      %1097 = vmatmul.mubr.f32.gmra.mxu0 %v968
      %v1098 = vpop.f32.mrf.mxu0
      %v1099 = vadd.f32 0.0, %v1098
      %v1100 = vpop.f32.mrf.mxu0
      %1101 = vmatprep.mubr.f32.mxu0 0.0
      %1102 = vmatmul.mubr.f32.gmra.mxu0 %v971
      %v1103 = vpop.f32.mrf.mxu0
      %v1104 = vadd.f32 0.0, %v1103
      %v1105 = vpop.f32.mrf.mxu0
      %1106 = vmatprep.mubr.f32.mxu0 0.0
      %1107 = vmatmul.mubr.f32.gmra.mxu0 %v974
      %v1108 = vpop.f32.mrf.mxu0
      %v1109 = vadd.f32 0.0, %v1108
      %v1110 = vpop.f32.mrf.mxu0
      %1111 = vmatprep.mubr.f32.mxu0 0.0
      %1112 = vmatmul.mubr.f32.gmra.mxu0 %v977
      %v1113 = vpop.f32.mrf.mxu0
      %v1114 = vadd.f32 0.0, %v1113
      %v1115 = vpop.f32.mrf.mxu0
      %1116 = vmatprep.mubr.f32.mxu0 0.0
      %1117 = vmatmul.mubr.f32.gmra.mxu0 %v980
      %v1118 = vpop.f32.mrf.mxu0
      %v1119 = vadd.f32 0.0, %v1118
      %v1120 = vpop.f32.mrf.mxu0
      %1121 = vmatprep.mubr.f32.mxu0 0.0
      %1122 = vmatmul.mubr.f32.gmra.mxu0 %v983
      %v1123 = vpop.f32.mrf.mxu0
      %v1124 = vadd.f32 0.0, %v1123
      %v1125 = vpop.f32.mrf.mxu0
      %1126 = vmatprep.mubr.f32.mxu0 0.0
      %1127 = vmatmul.mubr.f32.gmra.mxu0 %v986
      %v1128 = vpop.f32.mrf.mxu0
      %v1129 = vadd.f32 0.0, %v1128
      %v1130 = vpop.f32.mrf.mxu0
      %1131 = vmatprep.mubr.f32.mxu0 0.0
      %1132 = vmatmul.mubr.f32.gmra.mxu0 %v989
      %v1133 = vpop.f32.mrf.mxu0
      %v1134 = vadd.f32 0.0, %v1133
      %v1135 = vpop.f32.mrf.mxu0
      %1136 = vmatprep.mubr.f32.mxu0 0.0
      %1137 = vmatmul.mubr.f32.gmra.mxu0 %v992
      %v1138 = vpop.f32.mrf.mxu0
      %v1139 = vadd.f32 0.0, %v1138
      %v1140 = vpop.f32.mrf.mxu0
      %1141 = vmatprep.mubr.f32.mxu0 0.0
      %1142 = vmatmul.mubr.f32.gmra.mxu0 %v995
      %v1143 = vpop.f32.mrf.mxu0
      %v1144 = vadd.f32 0.0, %v1143
      %v1145 = vpop.f32.mrf.mxu0
      %1146 = vmatprep.mubr.f32.mxu0 0.0
      %1147 = vmatmul.mubr.f32.gmra.mxu0 %v998
      %v1148 = vpop.f32.mrf.mxu0
      %v1149 = vadd.f32 0.0, %v1148
      %v1150 = vpop.f32.mrf.mxu0
      %1151 = vmatprep.mubr.f32.mxu0 0.0
      %1152 = vmatmul.mubr.f32.gmra.mxu0 %v1001
      %v1153 = vpop.f32.mrf.mxu0
      %v1154 = vadd.f32 0.0, %v1153
      %v1155 = vpop.f32.mrf.mxu0
      %1156 = vmatprep.mubr.f32.mxu0 0.0
      %1157 = vmatmul.mubr.f32.gmra.mxu0 %v1004
      %v1158 = vpop.f32.mrf.mxu0
      %v1159 = vadd.f32 0.0, %v1158
      %v1160 = vpop.f32.mrf.mxu0
      %1161 = vmatprep.mubr.f32.mxu0 0.0
      %1162 = vmatmul.mubr.f32.gmra.mxu0 %v1007
      %v1163 = vpop.f32.mrf.mxu0
      %v1164 = vadd.f32 0.0, %v1163
      %v1165 = vpop.f32.mrf.mxu0
      %1166 = vdwg.mxu0
      %v1167 = vadd.f32 %v916, %v1079
      %v1168 = vadd.f32 %v917, %v1084
      %v1169 = vadd.f32 %v918, %v1089
      %v1170 = vadd.f32 %v919, %v1094
      %v1171 = vadd.f32 %v920, %v1099
      %v1172 = vadd.f32 %v921, %v1104
      %v1173 = vadd.f32 %v922, %v1109
      %v1174 = vadd.f32 %v923, %v1114
      %v1175 = vadd.f32 %v924, %v1119
      %v1176 = vadd.f32 %v925, %v1124
      %v1177 = vadd.f32 %v926, %v1129
      %v1178 = vadd.f32 %v927, %v1134
      %v1179 = vadd.f32 %v928, %v1139
      %v1180 = vadd.f32 %v929, %v1144
      %v1181 = vadd.f32 %v930, %v1149
      %v1182 = vadd.f32 %v931, %v1154
      %v1183 = vadd.f32 %v932, %v1159
      %v1184 = vadd.f32 %v933, %v1164
      %vm1185 = vcmp.gt.f32.partialorder %v1167, 0.0
      %vm1186 = vcmp.gt.f32.partialorder %v1168, 0.0
      %vm1187 = vcmp.gt.f32.partialorder %v1169, 0.0
      %vm1188 = vcmp.gt.f32.partialorder %v1170, 0.0
      %vm1189 = vcmp.gt.f32.partialorder %v1171, 0.0
      %vm1190 = vcmp.gt.f32.partialorder %v1172, 0.0
      %vm1191 = vcmp.gt.f32.partialorder %v1173, 0.0
      %vm1192 = vcmp.gt.f32.partialorder %v1174, 0.0
      %vm1193 = vcmp.gt.f32.partialorder %v1175, 0.0
      %vm1194 = vcmp.gt.f32.partialorder %v1176, 0.0
      %vm1195 = vcmp.gt.f32.partialorder %v1177, 0.0
      %vm1196 = vcmp.gt.f32.partialorder %v1178, 0.0
      %vm1197 = vcmp.gt.f32.partialorder %v1179, 0.0
      %vm1198 = vcmp.gt.f32.partialorder %v1180, 0.0
      %vm1199 = vcmp.gt.f32.partialorder %v1181, 0.0
      %vm1200 = vcmp.gt.f32.partialorder %v1182, 0.0
      %vm1201 = vcmp.gt.f32.partialorder %v1183, 0.0
      %vm1202 = vcmp.gt.f32.partialorder %v1184, 0.0
      %v1203 = vmul.f32 %v1167, 0.2
      %v1204 = vmul.f32 %v1168, 0.2
      %v1205 = vmul.f32 %v1169, 0.2
      %v1206 = vmul.f32 %v1170, 0.2
      %v1207 = vmul.f32 %v1171, 0.2
      %v1208 = vmul.f32 %v1172, 0.2
      %v1209 = vmul.f32 %v1173, 0.2
      %v1210 = vmul.f32 %v1174, 0.2
      %v1211 = vmul.f32 %v1175, 0.2
      %v1212 = vmul.f32 %v1176, 0.2
      %v1213 = vmul.f32 %v1177, 0.2
      %v1214 = vmul.f32 %v1178, 0.2
      %v1215 = vmul.f32 %v1179, 0.2
      %v1216 = vmul.f32 %v1180, 0.2
      %v1217 = vmul.f32 %v1181, 0.2
      %v1218 = vmul.f32 %v1182, 0.2
      %v1219 = vmul.f32 %v1183, 0.2
      %v1220 = vmul.f32 %v1184, 0.2
      %v1221 = vsel %vm1185, %v1167, %v1203
      %v1222 = vsel %vm1186, %v1168, %v1204
      %v1223 = vsel %vm1187, %v1169, %v1205
      %v1224 = vsel %vm1188, %v1170, %v1206
      %v1225 = vsel %vm1189, %v1171, %v1207
      %v1226 = vsel %vm1190, %v1172, %v1208
      %v1227 = vsel %vm1191, %v1173, %v1209
      %v1228 = vsel %vm1192, %v1174, %v1210
      %v1229 = vsel %vm1193, %v1175, %v1211
      %v1230 = vsel %vm1194, %v1176, %v1212
      %v1231 = vsel %vm1195, %v1177, %v1213
      %v1232 = vsel %vm1196, %v1178, %v1214
      %v1233 = vsel %vm1197, %v1179, %v1215
      %v1234 = vsel %vm1198, %v1180, %v1216
      %v1235 = vsel %vm1199, %v1181, %v1217
      %v1236 = vsel %vm1200, %v1182, %v1218
      %v1237 = vsel %vm1201, %v1183, %v1219
      %v1238 = vsel %vm1202, %v1184, %v1220
      %vm1239 = vcmask 64512
      %1240 = vst.msk [vmem:[%s170] sm:$0xff] %vm1239, %v1221
      %1241 = vst.msk [vmem:[%s170 + $0x8] sm:$0xff] %vm1239, %v1222
      %1242 = vst.msk [vmem:[%s170 + $0x10] sm:$0xff] %vm1239, %v1223
      %1243 = vst.msk [vmem:[%s170 + $0x18] sm:$0xff] %vm1239, %v1224
      %1244 = vst.msk [vmem:[%s170 + $0x20] sm:$0xff] %vm1239, %v1225
      %1245 = vst.msk [vmem:[%s170 + $0x28] sm:$0xff] %vm1239, %v1226
      %1246 = vst.msk [vmem:[%s170 + $0x30] sm:$0xff] %vm1239, %v1227
      %1247 = vst.msk [vmem:[%s170 + $0x38] sm:$0xff] %vm1239, %v1228
      %1248 = vst.msk [vmem:[%s170 + $0x40] sm:$0xff] %vm1239, %v1229
      %1249 = vst.msk [vmem:[%s170 + $0x48] sm:$0xff] %vm1239, %v1230
      %1250 = vst.msk [vmem:[%s170 + $0x50] sm:$0xff] %vm1239, %v1231
      %1251 = vst.msk [vmem:[%s170 + $0x58] sm:$0xff] %vm1239, %v1232
      %1252 = vst.msk [vmem:[%s170 + $0x60] sm:$0xff] %vm1239, %v1233
      %1253 = vst.msk [vmem:[%s170 + $0x68] sm:$0xff] %vm1239, %v1234
      %1254 = vst.msk [vmem:[%s170 + $0x70] sm:$0xff] %vm1239, %v1235
      %1255 = vst.msk [vmem:[%s170 + $0x78] sm:$0xff] %vm1239, %v1236
      %1256 = vst.msk [vmem:[%s170 + $0x80] sm:$0xff] %vm1239, %v1237
      %1257 = vst.msk [vmem:[%s170 + $0x88] sm:$0xff] %vm1239, %v1238
      %p1258 = scmp.lt.s32.totalorder %s14, 1
      %s1259 = scalar_select %p1258, %s14, 1
      %s1260 = smul.addr %s1259, 18
      %s1261 = smul.addr %s1260, 8
      %s1262 = scalar_lea.vmem %s3, %s1261
      // Predicated region
      $region33: #{tpu_custom_call.1} parent=31 // pred_check
        %p1263 = pneg %p100
      $region34: #{tpu_custom_call.1} parent=31 // pred_check_branch
        %1265 = sbr.rel (%p1263) target = $region36
      $region35: #{tpu_custom_call.1} parent=31 // pred_region
        _
      $region36: #{tpu_custom_call.1} parent=31 // pred_fallthru
        _
    $region32: #{tpu_custom_call.1} parent=5 // pred_fallthru
      _
    %p1266 = scmp.le.s32.totalorder 2, %s9
    // Predicated region
    $region37: #{tpu_custom_call.1} parent=5 // pred_check
      %p1267 = pneg %p1266
    $region38: #{tpu_custom_call.1} parent=5 // pred_check_branch
      %1269 = sbr.rel (%p1267) target = $region40
    $region39: #{tpu_custom_call.1} parent=5 // pred_region
      %s1270 = ssub.s32 %s9, 2
      // Predicated region
      $region41: #{tpu_custom_call.1} parent=39 // pred_check
        %p1271 = pneg %p106
      $region42: #{tpu_custom_call.1} parent=39 // pred_check_branch
        %1273 = sbr.rel (%p1271) target = $region44
      $region43: #{tpu_custom_call.1} parent=39 // pred_region
        %p1274 = scmp.lt.s32.totalorder %s15, 1
        %s1275 = scalar_select %p1274, %s15, 1
        %s1276 = smul.addr %s1275, 18
        %s1277 = smul.addr %s1276, 8
        %s1278 = scalar_lea.vmem %s3, %s1277
      $region44: #{tpu_custom_call.1} parent=39 // pred_fallthru
        _
    $region40: #{tpu_custom_call.1} parent=5 // pred_fallthru
      _
  $region6: #{tpu_custom_call.1} parent=0 // loop_footer
    %s13 = sadd.s32 1, %s9
  $region7: #{tpu_custom_call.1} parent=0 // loop_footer_branch
    %8 = sbr.rel target = $region3
  $region8: #{tpu_custom_call.1} parent=0 // loop_exit
    _

</llo_original>
